<compile_context>
chip_gen: v7x
topology: tpu7x:2x2x1
jax: 0.10.0
libtpu: 0.0.40
codegen_flags: <defaults>
</compile_context>

<pallas_src>
import jax
import jax.numpy as jnp
from jax.experimental import pallas as pl
from jax.experimental.pallas import tpu as pltpu


def masked_classifier_kernel(x_ref, w1_ref, b1_ref, w2_ref, b2_ref,
                             w3_ref, b3_ref, o_ref):
    # x_ref : (tm, Cin*L)    raw NCL input rows, flattened row-major (free reshape)
    # w1_ref: (Cin*L, C*L)   expanded 1x1-conv weight (delta in l)
    # b1_ref: (1, C*L)       conv bias repeated L times per channel
    # w2_ref: (C*L, F)       fc1 weight^T (already in PyTorch flatten order)
    # b2_ref: (1, F)
    # w3_ref: (NC, F)        fc2 weight (contracted on the VPU, not the MXU)
    # b3_ref: (1, NC)
    # o_ref : (tm, NC)
    x = x_ref[...]
    # conv1 (1x1) + channel-major flatten fused into a single MXU matmul.
    h = jnp.dot(x, w1_ref[...], preferred_element_type=jnp.float32)   # (tm, C*L)
    h = jnp.maximum(h + b1_ref[...], 0.0)
    # fc1 + ReLU -> (tm, F): lane-dense K=1024 MXU matmul, no relayout needed.
    z = jnp.dot(h, w2_ref[...], preferred_element_type=jnp.float32)
    z = jnp.maximum(z + b2_ref[...], 0.0)
    # fc2 (NC tiny, default 1): VPU multiply + XLU lane reduce; avoids an N=1
    # MXU pass and its masked single-lane result path.
    y = jnp.sum(z[:, None, :] * w3_ref[...][None, :, :], axis=-1)     # (tm, NC)
    o_ref[...] = (y + b3_ref[...]).astype(o_ref.dtype)


def prepare_params(params, vector_length):
    """One-time weight preprocessing (hoisted out of the per-call path).

    params: (w_conv (C,Cin,1), b_conv (C,), w_fc1 (F, C*L), b_fc1 (F,),
             w_fc2 (NC, F), b_fc2 (NC,))
    """
    w_conv, b_conv, w_fc1, b_fc1, w_fc2, b_fc2 = params
    C, Cin, _ = w_conv.shape
    L = vector_length
    F = w_fc1.shape[0]
    NC = w_fc2.shape[0]

    # Expanded conv weight: W1e[i*L + l, c*L + l'] = w_conv[c, i, 0] * (l == l')
    eye_l = jnp.eye(L, dtype=jnp.float32)
    w1e = (jnp.transpose(w_conv[:, :, 0].astype(jnp.float32), (1, 0))[:, None, :, None]
           * eye_l[None, :, None, :]).reshape(Cin * L, C * L)
    b1 = jnp.repeat(b_conv.astype(jnp.float32), L).reshape(1, C * L)
    w2t = jnp.transpose(w_fc1.astype(jnp.float32), (1, 0))            # (C*L, F)
    b2 = b_fc1.reshape(1, F).astype(jnp.float32)
    w3 = w_fc2.astype(jnp.float32)                                    # (NC, F)
    b3 = b_fc2.reshape(1, NC).astype(jnp.float32)
    return (w1e, b1, w2t, b2, w3, b3)


def _pick_batch_tile(B):
    """Largest power-of-two batch tile that divides B (8..512); else full B."""
    for tm in (512, 256, 128, 64, 32, 16, 8):
        if B % tm == 0:
            return tm
    return B   # tiny / odd batch: single full-extent block (still legal)


@jax.jit
def masked_classifier_fwd(x_ncl, prepped):
    """Forward pass. x_ncl: (B, Cin, L) float32; prepped: prepare_params(...)."""
    w1e, b1, w2t, b2, w3, b3 = prepped
    B, Cin, L = x_ncl.shape
    CL = w1e.shape[1]
    F = w2t.shape[1]
    NC = w3.shape[0]

    # Row-major contiguous reshape: metadata only, no HBM transpose copy.
    x2d = x_ncl.reshape(B, Cin * L).astype(jnp.float32)

    tm = _pick_batch_tile(B)
    grid = (B // tm,)

    def bcast(shape):
        # Weights/biases: same block for every batch tile -> stay VMEM-resident.
        return pl.BlockSpec(shape, lambda i: (0,) * len(shape))

    # TODO(synk): for very large batches a lane-padded (tm, 128) output slab
    # would avoid the masked single-lane stores; negligible at these sizes.
    return pl.pallas_call(
        masked_classifier_kernel,
        out_shape=jax.ShapeDtypeStruct((B, NC), jnp.float32),
        grid=grid,
        in_specs=[pl.BlockSpec((tm, Cin * L), lambda i: (i, 0)),
                  bcast((Cin * L, CL)), bcast((1, CL)),
                  bcast((CL, F)), bcast((1, F)),
                  bcast((NC, F)), bcast((1, NC))],
        out_specs=pl.BlockSpec((tm, NC), lambda i: (i, 0)),
        compiler_params=pltpu.CompilerParams(
            dimension_semantics=("parallel",)),
    )(x2d, w1e, b1, w2t, b2, w3, b3)


if __name__ == "__main__":
    # Shapes implied by the module: vector_length=16, in_channels=2,
    # conv_out_channels=64, fc_features=64, num_classes=1.
    B, Cin, L, C, F, NC = 2, 2, 16, 64, 64, 1

    key = jax.random.PRNGKey(0)
    ks = jax.random.split(key, 7)
    x = jax.random.normal(ks[0], (B, Cin, L), jnp.float32)
    # Deterministic synthetic parameters (scaled normals; no checkpoint load).
    w_conv = jax.random.normal(ks[1], (C, Cin, 1), jnp.float32) * 0.5
    b_conv = jax.random.normal(ks[2], (C,), jnp.float32) * 0.1
    w_fc1 = jax.random.normal(ks[3], (F, C * L), jnp.float32) * 0.05
    b_fc1 = jax.random.normal(ks[4], (F,), jnp.float32) * 0.1
    w_fc2 = jax.random.normal(ks[5], (NC, F), jnp.float32) * 0.1
    b_fc2 = jax.random.normal(ks[6], (NC,), jnp.float32) * 0.1
    params = (w_conv, b_conv, w_fc1, b_fc1, w_fc2, b_fc2)

    # Weight prep runs ONCE and is cached; forward calls reuse `prepped`.
    prepped = jax.block_until_ready(prepare_params(params, L))

    out = jax.block_until_ready(masked_classifier_fwd(x, prepped))

    # Pure-JAX reference replicating the PyTorch forward semantics (NCL layout).
    h_ref = jnp.maximum(
        jnp.einsum('ock,bcl->bol', w_conv, x) + b_conv[None, :, None], 0.0)
    flat_ref = h_ref.reshape(B, C * L)           # channel-major flatten (c, l)
    z_ref = jnp.maximum(flat_ref @ w_fc1.T + b_fc1, 0.0)
    ref = z_ref @ w_fc2.T + b_fc2

    assert out.shape == (B, NC)
    assert jnp.allclose(out, ref, atol=1e-4, rtol=1e-4), (out, ref)
    print("KERNEL_OK")
</pallas_src>

<mosaic_0001>
module attributes {stable_mosaic.version = 11 : i64} {
  func.func @masked_classifier_kernel(%arg0: i32, %arg1: memref<2x32xf32, #tpu.memory_space<vmem>>, %arg2: memref<32x1024xf32, #tpu.memory_space<vmem>>, %arg3: memref<1x1024xf32, #tpu.memory_space<vmem>>, %arg4: memref<1024x64xf32, #tpu.memory_space<vmem>>, %arg5: memref<1x64xf32, #tpu.memory_space<vmem>>, %arg6: memref<1x64xf32, #tpu.memory_space<vmem>>, %arg7: memref<1x1xf32, #tpu.memory_space<vmem>>, %arg8: memref<2x1xf32, #tpu.memory_space<vmem>>) attributes {dimension_semantics = [#tpu.dimension_semantics<parallel>], iteration_bounds = array<i64: 1>, scalar_prefetch = 0 : i64, scratch_operands = 0 : i64, tpu.core_type = #tpu.core_type<tc>, window_params = [{transform_indices = @transform_0, window_bounds = array<i64: 2, 32>}, {pipeline_mode = #tpu.pipeline_mode<synchronous>, transform_indices = @transform_1, window_bounds = array<i64: 32, 1024>}, {pipeline_mode = #tpu.pipeline_mode<synchronous>, transform_indices = @transform_2, window_bounds = array<i64: 1, 1024>}, {pipeline_mode = #tpu.pipeline_mode<synchronous>, transform_indices = @transform_3, window_bounds = array<i64: 1024, 64>}, {pipeline_mode = #tpu.pipeline_mode<synchronous>, transform_indices = @transform_4, window_bounds = array<i64: 1, 64>}, {pipeline_mode = #tpu.pipeline_mode<synchronous>, transform_indices = @transform_5, window_bounds = array<i64: 1, 64>}, {pipeline_mode = #tpu.pipeline_mode<synchronous>, transform_indices = @transform_6, window_bounds = array<i64: 1, 1>}, {transform_indices = @transform_7, window_bounds = array<i64: 2, 1>}]} {
    %c0 = arith.constant 0 : index
    %c0_0 = arith.constant 0 : index
    %0 = vector.load %arg1[%c0, %c0_0] : memref<2x32xf32, #tpu.memory_space<vmem>>, vector<2x32xf32>
    %c0_1 = arith.constant 0 : index
    %c0_2 = arith.constant 0 : index
    %1 = vector.load %arg2[%c0_1, %c0_2] : memref<32x1024xf32, #tpu.memory_space<vmem>>, vector<32x1024xf32>
    %cst = arith.constant dense<0.000000e+00> : vector<2x1024xf32>
    %2 = tpu.matmul %0, %1, %cst {dimension_numbers = #tpu.dot_dimension_numbers<[1], [0], [0], [1], [0, 0, 1, 1], [], []>} : vector<2x32xf32>, vector<32x1024xf32>, vector<2x1024xf32> -> vector<2x1024xf32>
    %c0_3 = arith.constant 0 : index
    %c0_4 = arith.constant 0 : index
    %3 = vector.load %arg3[%c0_3, %c0_4] : memref<1x1024xf32, #tpu.memory_space<vmem>>, vector<1x1024xf32>
    %4 = vector.broadcast %3 : vector<1x1024xf32> to vector<2x1024xf32>
    %5 = arith.addf %2, %4 : vector<2x1024xf32>
    %cst_5 = arith.constant 0.000000e+00 : f32
    %6 = vector.broadcast %cst_5 : f32 to vector<2x1024xf32>
    %7 = arith.maximumf %5, %6 : vector<2x1024xf32>
    %c0_6 = arith.constant 0 : index
    %c0_7 = arith.constant 0 : index
    %8 = vector.load %arg4[%c0_6, %c0_7] : memref<1024x64xf32, #tpu.memory_space<vmem>>, vector<1024x64xf32>
    %cst_8 = arith.constant dense<0.000000e+00> : vector<2x64xf32>
    %9 = tpu.matmul %7, %8, %cst_8 {dimension_numbers = #tpu.dot_dimension_numbers<[1], [0], [0], [1], [0, 0, 1, 1], [], []>} : vector<2x1024xf32>, vector<1024x64xf32>, vector<2x64xf32> -> vector<2x64xf32>
    %c0_9 = arith.constant 0 : index
    %c0_10 = arith.constant 0 : index
    %10 = vector.load %arg5[%c0_9, %c0_10] : memref<1x64xf32, #tpu.memory_space<vmem>>, vector<1x64xf32>
    %11 = vector.broadcast %10 : vector<1x64xf32> to vector<2x64xf32>
    %12 = arith.addf %9, %11 : vector<2x64xf32>
    %cst_11 = arith.constant 0.000000e+00 : f32
    %13 = vector.broadcast %cst_11 : f32 to vector<2x64xf32>
    %14 = arith.maximumf %12, %13 : vector<2x64xf32>
    %15 = vector.shape_cast %14 : vector<2x64xf32> to vector<2x1x64xf32>
    %c0_12 = arith.constant 0 : index
    %c0_13 = arith.constant 0 : index
    %16 = vector.load %arg6[%c0_12, %c0_13] : memref<1x64xf32, #tpu.memory_space<vmem>>, vector<1x64xf32>
    %17 = vector.shape_cast %16 : vector<1x64xf32> to vector<1x1x64xf32>
    %18 = vector.broadcast %17 : vector<1x1x64xf32> to vector<2x1x64xf32>
    %19 = arith.mulf %15, %18 : vector<2x1x64xf32>
    %cst_14 = arith.constant dense<0.000000e+00> : vector<2x1xf32>
    %20 = vector.multi_reduction <add>, %19, %cst_14 [2] : vector<2x1x64xf32> to vector<2x1xf32>
    %c0_15 = arith.constant 0 : index
    %c0_16 = arith.constant 0 : index
    %21 = vector.load %arg7[%c0_15, %c0_16] : memref<1x1xf32, #tpu.memory_space<vmem>>, vector<1x1xf32>
    %22 = vector.broadcast %21 : vector<1x1xf32> to vector<2x1xf32>
    %23 = arith.addf %20, %22 : vector<2x1xf32>
    %c0_17 = arith.constant 0 : index
    %c0_18 = arith.constant 0 : index
    %24 = vector.load %arg8[%c0_17, %c0_18] : memref<2x1xf32, #tpu.memory_space<vmem>>, vector<2x1xf32>
    tpu.vector_store %arg8[%c0_17, %c0_18], %23 {strides = array<i32>} : memref<2x1xf32, #tpu.memory_space<vmem>>, vector<2x1xf32>,
    return
  }
  func.func @transform_0(%arg0: i32) -> (i32, i32) {
    %c0_i32 = arith.constant 0 : i32
    %c0_i32_0 = arith.constant 0 : i32
    return %arg0, %c0_i32 : i32, i32
  }
  func.func @transform_1(%arg0: i32) -> (i32, i32) {
    %c0_i32 = arith.constant 0 : i32
    %c0_i32_0 = arith.constant 0 : i32
    %c0_i32_1 = arith.constant 0 : i32
    return %c0_i32, %c0_i32_0 : i32, i32
  }
  func.func @transform_2(%arg0: i32) -> (i32, i32) {
    %c0_i32 = arith.constant 0 : i32
    %c0_i32_0 = arith.constant 0 : i32
    %c0_i32_1 = arith.constant 0 : i32
    return %c0_i32, %c0_i32_0 : i32, i32
  }
  func.func @transform_3(%arg0: i32) -> (i32, i32) {
    %c0_i32 = arith.constant 0 : i32
    %c0_i32_0 = arith.constant 0 : i32
    %c0_i32_1 = arith.constant 0 : i32
    return %c0_i32, %c0_i32_0 : i32, i32
  }
  func.func @transform_4(%arg0: i32) -> (i32, i32) {
    %c0_i32 = arith.constant 0 : i32
    %c0_i32_0 = arith.constant 0 : i32
    %c0_i32_1 = arith.constant 0 : i32
    return %c0_i32, %c0_i32_0 : i32, i32
  }
  func.func @transform_5(%arg0: i32) -> (i32, i32) {
    %c0_i32 = arith.constant 0 : i32
    %c0_i32_0 = arith.constant 0 : i32
    %c0_i32_1 = arith.constant 0 : i32
    return %c0_i32, %c0_i32_0 : i32, i32
  }
  func.func @transform_6(%arg0: i32) -> (i32, i32) {
    %c0_i32 = arith.constant 0 : i32
    %c0_i32_0 = arith.constant 0 : i32
    %c0_i32_1 = arith.constant 0 : i32
    return %c0_i32, %c0_i32_0 : i32, i32
  }
  func.func @transform_7(%arg0: i32) -> (i32, i32) {
    %c0_i32 = arith.constant 0 : i32
    %c0_i32_0 = arith.constant 0 : i32
    return %arg0, %c0_i32 : i32, i32
  }
}

</mosaic_0001>

<llo_original>
// kernel: masked_classifier_fwd.1
$region0: #{masked_classifier_fwd.1}
  #allocation0 [shape = 'u32[]', space=smem, size = 0x4, offset = 0x4, fixed_abs, tag = 'smem constant byte address 0x4 - core index']
  #allocation1 [shape = 'u32[144,128]{1,0:T(1,128)}', space=vmem, size = 0x12000, scoped, tag = 'internal scratch']
  #allocation2 [shape = 'f32[1,1]{1,0:T(1,128)S(1)}', space=vmem, size = 0x200, scoped, tag = 'scoped memory for masked_classifier_fwd.1']
  %s0 = inlined_call_operand.vmem [shape: f32[2,32], index: 0, kind: input, shape index: {}]
  %s1 = inlined_call_operand.vmem [shape: f32[32,1024], index: 1, kind: input, shape index: {}]
  %s2 = inlined_call_operand.vmem [shape: f32[1,1024], index: 2, kind: input, shape index: {}]
  %s3 = inlined_call_operand.vmem [shape: f32[1024,64], index: 3, kind: input, shape index: {}]
  %s4 = inlined_call_operand.vmem [shape: f32[1,64], index: 4, kind: input, shape index: {}]
  %s5 = inlined_call_operand.vmem [shape: f32[1,64], index: 5, kind: input, shape index: {}]
  %s6 = inlined_call_operand.<no memory space> [shape: f32[1,1], index: 6, kind: input, shape index: {}]
  %s7 = inlined_call_operand.vmem [shape: f32[2,1], index: 7, kind: output, shape index: {}]
  %s8 = sld [smem:[#allocation0]]
  $region38: #{masked_classifier_fwd.1} parent=0
    _
  %s10 = ssub.s32 1, %s8
  %s11 = scalar_select 0, %s10, %s8
  %v12 = vstv %s6
  %13 = vst [vmem:[#allocation2] sm:$0x1] %v12
  // Predicated region
  $region2: #{masked_classifier_fwd.1} parent=0 // pred_check
    _
  $region3: #{masked_classifier_fwd.1} parent=0 // pred_check_branch
    %15 = sbr.rel (0) target = $region5
  $region4: #{masked_classifier_fwd.1} parent=0 // pred_region
    _
  $region5: #{masked_classifier_fwd.1} parent=0 // pred_fallthru
    _
  // Predicated region
  $region6: #{masked_classifier_fwd.1} parent=0 // pred_check
    _
  $region7: #{masked_classifier_fwd.1} parent=0 // pred_check_branch
    %17 = sbr.rel (0) target = $region9
  $region8: #{masked_classifier_fwd.1} parent=0 // pred_region
    _
  $region9: #{masked_classifier_fwd.1} parent=0 // pred_fallthru
    _
  // Predicated region
  $region10: #{masked_classifier_fwd.1} parent=0 // pred_check
    _
  $region11: #{masked_classifier_fwd.1} parent=0 // pred_check_branch
    %19 = sbr.rel (0) target = $region13
  $region12: #{masked_classifier_fwd.1} parent=0 // pred_region
    _
  $region13: #{masked_classifier_fwd.1} parent=0 // pred_fallthru
    _
  // Predicated region
  $region14: #{masked_classifier_fwd.1} parent=0 // pred_check
    _
  $region15: #{masked_classifier_fwd.1} parent=0 // pred_check_branch
    %21 = sbr.rel (0) target = $region17
  $region16: #{masked_classifier_fwd.1} parent=0 // pred_region
    _
  $region17: #{masked_classifier_fwd.1} parent=0 // pred_fallthru
    _
  // Predicated region
  $region18: #{masked_classifier_fwd.1} parent=0 // pred_check
    _
  $region19: #{masked_classifier_fwd.1} parent=0 // pred_check_branch
    %23 = sbr.rel (0) target = $region21
  $region20: #{masked_classifier_fwd.1} parent=0 // pred_region
    _
  $region21: #{masked_classifier_fwd.1} parent=0 // pred_fallthru
    _
  // Predicated region
  $region22: #{masked_classifier_fwd.1} parent=0 // pred_check
    _
  $region23: #{masked_classifier_fwd.1} parent=0 // pred_check_branch
    %25 = sbr.rel (0) target = $region25
  $region24: #{masked_classifier_fwd.1} parent=0 // pred_region
    _
  $region25: #{masked_classifier_fwd.1} parent=0 // pred_fallthru
    _
  // Predicated region
  $region26: #{masked_classifier_fwd.1} parent=0 // pred_check
    _
  $region27: #{masked_classifier_fwd.1} parent=0 // pred_check_branch
    %27 = sbr.rel (0) target = $region29
  $region28: #{masked_classifier_fwd.1} parent=0 // pred_region
    _
  $region29: #{masked_classifier_fwd.1} parent=0 // pred_fallthru
    _
  %v28 = vld [vmem:[%s0] sm:$0x3]
  %v29 = vld [vmem:[%s1] sm:$0xff]
  %v30 = vld [vmem:[%s1 + $0x8] sm:$0xff]
  %v31 = vld [vmem:[%s1 + $0x10] sm:$0xff]
  %v32 = vld [vmem:[%s1 + $0x18] sm:$0xff]
  %v33 = vld [vmem:[%s1 + $0x20] sm:$0xff]
  %v34 = vld [vmem:[%s1 + $0x28] sm:$0xff]
  %v35 = vld [vmem:[%s1 + $0x30] sm:$0xff]
  %v36 = vld [vmem:[%s1 + $0x38] sm:$0xff]
  %v37 = vld [vmem:[%s1 + $0x40] sm:$0xff]
  %v38 = vld [vmem:[%s1 + $0x48] sm:$0xff]
  %v39 = vld [vmem:[%s1 + $0x50] sm:$0xff]
  %v40 = vld [vmem:[%s1 + $0x58] sm:$0xff]
  %v41 = vld [vmem:[%s1 + $0x60] sm:$0xff]
  %v42 = vld [vmem:[%s1 + $0x68] sm:$0xff]
  %v43 = vld [vmem:[%s1 + $0x70] sm:$0xff]
  %v44 = vld [vmem:[%s1 + $0x78] sm:$0xff]
  %v45 = vld [vmem:[%s1 + $0x80] sm:$0xff]
  %v46 = vld [vmem:[%s1 + $0x88] sm:$0xff]
  %v47 = vld [vmem:[%s1 + $0x90] sm:$0xff]
  %v48 = vld [vmem:[%s1 + $0x98] sm:$0xff]
  %v49 = vld [vmem:[%s1 + $0xa0] sm:$0xff]
  %v50 = vld [vmem:[%s1 + $0xa8] sm:$0xff]
  %v51 = vld [vmem:[%s1 + $0xb0] sm:$0xff]
  %v52 = vld [vmem:[%s1 + $0xb8] sm:$0xff]
  %v53 = vld [vmem:[%s1 + $0xc0] sm:$0xff]
  %v54 = vld [vmem:[%s1 + $0xc8] sm:$0xff]
  %v55 = vld [vmem:[%s1 + $0xd0] sm:$0xff]
  %v56 = vld [vmem:[%s1 + $0xd8] sm:$0xff]
  %v57 = vld [vmem:[%s1 + $0xe0] sm:$0xff]
  %v58 = vld [vmem:[%s1 + $0xe8] sm:$0xff]
  %v59 = vld [vmem:[%s1 + $0xf0] sm:$0xff]
  %v60 = vld [vmem:[%s1 + $0xf8] sm:$0xff]
  %v61 = vld [vmem:[%s2] sm:$0xff]
  %v63 = vlaneseq
  %v64 = vshrl.u32 %v63, 7
  %v65 = vsub.s32 0, %v64
  %v66 = vrot.slane %v61, %v65
  %v67 = vlaneseq
  %v68 = vshrl.u32 %v67, 7
  %v69 = vsub.s32 1, %v68
  %v70 = vrot.slane %v61, %v69
  %v71 = vlaneseq
  %v72 = vshrl.u32 %v71, 7
  %v73 = vsub.s32 2, %v72
  %v74 = vrot.slane %v61, %v73
  %v75 = vlaneseq
  %v76 = vshrl.u32 %v75, 7
  %v77 = vsub.s32 3, %v76
  %v78 = vrot.slane %v61, %v77
  %v79 = vlaneseq
  %v80 = vshrl.u32 %v79, 7
  %v81 = vsub.s32 4, %v80
  %v82 = vrot.slane %v61, %v81
  %v83 = vlaneseq
  %v84 = vshrl.u32 %v83, 7
  %v85 = vsub.s32 5, %v84
  %v86 = vrot.slane %v61, %v85
  %v87 = vlaneseq
  %v88 = vshrl.u32 %v87, 7
  %v89 = vsub.s32 6, %v88
  %v90 = vrot.slane %v61, %v89
  %v91 = vlaneseq
  %v92 = vshrl.u32 %v91, 7
  %v93 = vsub.s32 7, %v92
  %v94 = vrot.slane %v61, %v93
  %vm103 = vcmask 261120
  %v105 = vsel %vm103, %v28, 0
  %107 = vmatprep.subr.mxu0 %v30
  %108 = vmatpush1.msra.mxu0 %v29
  %109 = vmatprep.subr.mxu0 %v38
  %110 = vmatpush1.msra.mxu0 %v37
  %111 = vmatprep.subr.mxu0 %v46
  %112 = vmatpush1.msra.mxu0 %v45
  %113 = vmatprep.subr.mxu0 %v54
  %114 = vmatpush1.msra.mxu0 %v53
  %115 = vmatprep.subr.mxu0 0.0
  %116 = vmatpush1.msra.mxu0 0.0
  %117 = vmatprep.subr.mxu0 0.0
  %118 = vmatpush1.msra.mxu0 0.0
  %119 = vmatprep.subr.mxu0 0.0
  %120 = vmatpush1.msra.mxu0 0.0
  %121 = vmatprep.subr.mxu0 0.0
  %122 = vmatpush1.msra.mxu0 0.0
  %123 = vmatprep.subr.mxu0 0.0
  %124 = vmatpush1.msra.mxu0 0.0
  %125 = vmatprep.subr.mxu0 0.0
  %126 = vmatpush1.msra.mxu0 0.0
  %127 = vmatprep.subr.mxu0 0.0
  %128 = vmatpush1.msra.mxu0 0.0
  %129 = vmatprep.subr.mxu0 0.0
  %130 = vmatpush1.msra.mxu0 0.0
  %131 = vmatprep.subr.mxu0 0.0
  %132 = vmatpush1.msra.mxu0 0.0
  %133 = vmatprep.subr.mxu0 0.0
  %134 = vmatpush1.msra.mxu0 0.0
  %135 = vmatprep.subr.mxu0 0.0
  %136 = vmatpush1.msra.mxu0 0.0
  %137 = vmatprep.subr.mxu0 0.0
  %138 = vmatpush1.msra.mxu0 0.0
  %139 = vmatprep.subr.mxu0 0.0
  %140 = vmatpush1.msra.mxu0 0.0
  %141 = vmatprep.subr.mxu0 0.0
  %142 = vmatpush1.msra.mxu0 0.0
  %143 = vmatprep.subr.mxu0 0.0
  %144 = vmatpush1.msra.mxu0 0.0
  %145 = vmatprep.subr.mxu0 0.0
  %146 = vmatpush1.msra.mxu0 0.0
  %147 = vmatprep.subr.mxu0 0.0
  %148 = vmatpush1.msra.mxu0 0.0
  %149 = vmatprep.subr.mxu0 0.0
  %150 = vmatpush1.msra.mxu0 0.0
  %151 = vmatprep.subr.mxu0 0.0
  %152 = vmatpush1.msra.mxu0 0.0
  %153 = vmatprep.subr.mxu0 0.0
  %154 = vmatpush1.msra.mxu0 0.0
  %155 = vmatprep.subr.mxu0 0.0
  %156 = vmatpush1.msra.mxu0 0.0
  %157 = vmatprep.subr.mxu0 0.0
  %158 = vmatpush1.msra.mxu0 0.0
  %159 = vmatprep.subr.mxu0 0.0
  %160 = vmatpush1.msra.mxu0 0.0
  %161 = vmatprep.subr.mxu0 0.0
  %162 = vmatpush1.msra.mxu0 0.0
  %163 = vmatprep.subr.mxu0 0.0
  %164 = vmatpush1.msra.mxu0 0.0
  %165 = vmatprep.subr.mxu0 0.0
  %166 = vmatpush1.msra.mxu0 0.0
  %167 = vmatprep.subr.mxu0 0.0
  %168 = vmatpush1.msra.mxu0 0.0
  %169 = vmatprep.subr.mxu0 0.0
  %170 = vmatpush1.msra.mxu0 0.0
  %171 = vmatprep.mubr.f32.mxu0 0.0
  %172 = vmatmul.mubr.f32.gmra.mrb[0].mxu0 %v105
  %v173 = vpop.f32.mrb[0].mxu0
  %v174 = vadd.f32 %v66, %v173
  %v175 = vpop.f32.mrb[0].mxu0
  %v176 = vadd.f32 %v70, %v175
  %177 = vdwg.mxu0
  %178 = vmatprep.subr.mxu0 %v32
  %179 = vmatpush1.msra.mxu0 %v31
  %180 = vmatprep.subr.mxu0 %v40
  %181 = vmatpush1.msra.mxu0 %v39
  %182 = vmatprep.subr.mxu0 %v48
  %183 = vmatpush1.msra.mxu0 %v47
  %184 = vmatprep.subr.mxu0 %v56
  %185 = vmatpush1.msra.mxu0 %v55
  %186 = vmatprep.subr.mxu0 0.0
  %187 = vmatpush1.msra.mxu0 0.0
  %188 = vmatprep.subr.mxu0 0.0
  %189 = vmatpush1.msra.mxu0 0.0
  %190 = vmatprep.subr.mxu0 0.0
  %191 = vmatpush1.msra.mxu0 0.0
  %192 = vmatprep.subr.mxu0 0.0
  %193 = vmatpush1.msra.mxu0 0.0
  %194 = vmatprep.subr.mxu0 0.0
  %195 = vmatpush1.msra.mxu0 0.0
  %196 = vmatprep.subr.mxu0 0.0
  %197 = vmatpush1.msra.mxu0 0.0
  %198 = vmatprep.subr.mxu0 0.0
  %199 = vmatpush1.msra.mxu0 0.0
  %200 = vmatprep.subr.mxu0 0.0
  %201 = vmatpush1.msra.mxu0 0.0
  %202 = vmatprep.subr.mxu0 0.0
  %203 = vmatpush1.msra.mxu0 0.0
  %204 = vmatprep.subr.mxu0 0.0
  %205 = vmatpush1.msra.mxu0 0.0
  %206 = vmatprep.subr.mxu0 0.0
  %207 = vmatpush1.msra.mxu0 0.0
  %208 = vmatprep.subr.mxu0 0.0
  %209 = vmatpush1.msra.mxu0 0.0
  %210 = vmatprep.subr.mxu0 0.0
  %211 = vmatpush1.msra.mxu0 0.0
  %212 = vmatprep.subr.mxu0 0.0
  %213 = vmatpush1.msra.mxu0 0.0
  %214 = vmatprep.subr.mxu0 0.0
  %215 = vmatpush1.msra.mxu0 0.0
  %216 = vmatprep.subr.mxu0 0.0
  %217 = vmatpush1.msra.mxu0 0.0
  %218 = vmatprep.subr.mxu0 0.0
  %219 = vmatpush1.msra.mxu0 0.0
  %220 = vmatprep.subr.mxu0 0.0
  %221 = vmatpush1.msra.mxu0 0.0
  %222 = vmatprep.subr.mxu0 0.0
  %223 = vmatpush1.msra.mxu0 0.0
  %224 = vmatprep.subr.mxu0 0.0
  %225 = vmatpush1.msra.mxu0 0.0
  %226 = vmatprep.subr.mxu0 0.0
  %227 = vmatpush1.msra.mxu0 0.0
  %228 = vmatprep.subr.mxu0 0.0
  %229 = vmatpush1.msra.mxu0 0.0
  %230 = vmatprep.subr.mxu0 0.0
  %231 = vmatpush1.msra.mxu0 0.0
  %232 = vmatprep.subr.mxu0 0.0
  %233 = vmatpush1.msra.mxu0 0.0
  %234 = vmatprep.subr.mxu0 0.0
  %235 = vmatpush1.msra.mxu0 0.0
  %236 = vmatprep.subr.mxu0 0.0
  %237 = vmatpush1.msra.mxu0 0.0
  %238 = vmatprep.subr.mxu0 0.0
  %239 = vmatpush1.msra.mxu0 0.0
  %240 = vmatprep.subr.mxu0 0.0
  %241 = vmatpush1.msra.mxu0 0.0
  %242 = vmatprep.mubr.f32.mxu0 0.0
  %243 = vmatmul.mubr.f32.gmra.mrb[0].mxu0 %v105
  %v244 = vpop.f32.mrb[0].mxu0
  %v245 = vadd.f32 %v74, %v244
  %v246 = vpop.f32.mrb[0].mxu0
  %v247 = vadd.f32 %v78, %v246
  %248 = vdwg.mxu0
  %249 = vmatprep.subr.mxu0 %v34
  %250 = vmatpush1.msra.mxu0 %v33
  %251 = vmatprep.subr.mxu0 %v42
  %252 = vmatpush1.msra.mxu0 %v41
  %253 = vmatprep.subr.mxu0 %v50
  %254 = vmatpush1.msra.mxu0 %v49
  %255 = vmatprep.subr.mxu0 %v58
  %256 = vmatpush1.msra.mxu0 %v57
  %257 = vmatprep.subr.mxu0 0.0
  %258 = vmatpush1.msra.mxu0 0.0
  %259 = vmatprep.subr.mxu0 0.0
  %260 = vmatpush1.msra.mxu0 0.0
  %261 = vmatprep.subr.mxu0 0.0
  %262 = vmatpush1.msra.mxu0 0.0
  %263 = vmatprep.subr.mxu0 0.0
  %264 = vmatpush1.msra.mxu0 0.0
  %265 = vmatprep.subr.mxu0 0.0
  %266 = vmatpush1.msra.mxu0 0.0
  %267 = vmatprep.subr.mxu0 0.0
  %268 = vmatpush1.msra.mxu0 0.0
  %269 = vmatprep.subr.mxu0 0.0
  %270 = vmatpush1.msra.mxu0 0.0
  %271 = vmatprep.subr.mxu0 0.0
  %272 = vmatpush1.msra.mxu0 0.0
  %273 = vmatprep.subr.mxu0 0.0
  %274 = vmatpush1.msra.mxu0 0.0
  %275 = vmatprep.subr.mxu0 0.0
  %276 = vmatpush1.msra.mxu0 0.0
  %277 = vmatprep.subr.mxu0 0.0
  %278 = vmatpush1.msra.mxu0 0.0
  %279 = vmatprep.subr.mxu0 0.0
  %280 = vmatpush1.msra.mxu0 0.0
  %281 = vmatprep.subr.mxu0 0.0
  %282 = vmatpush1.msra.mxu0 0.0
  %283 = vmatprep.subr.mxu0 0.0
  %284 = vmatpush1.msra.mxu0 0.0
  %285 = vmatprep.subr.mxu0 0.0
  %286 = vmatpush1.msra.mxu0 0.0
  %287 = vmatprep.subr.mxu0 0.0
  %288 = vmatpush1.msra.mxu0 0.0
  %289 = vmatprep.subr.mxu0 0.0
  %290 = vmatpush1.msra.mxu0 0.0
  %291 = vmatprep.subr.mxu0 0.0
  %292 = vmatpush1.msra.mxu0 0.0
  %293 = vmatprep.subr.mxu0 0.0
  %294 = vmatpush1.msra.mxu0 0.0
  %295 = vmatprep.subr.mxu0 0.0
  %296 = vmatpush1.msra.mxu0 0.0
  %297 = vmatprep.subr.mxu0 0.0
  %298 = vmatpush1.msra.mxu0 0.0
  %299 = vmatprep.subr.mxu0 0.0
  %300 = vmatpush1.msra.mxu0 0.0
  %301 = vmatprep.subr.mxu0 0.0
  %302 = vmatpush1.msra.mxu0 0.0
  %303 = vmatprep.subr.mxu0 0.0
  %304 = vmatpush1.msra.mxu0 0.0
  %305 = vmatprep.subr.mxu0 0.0
  %306 = vmatpush1.msra.mxu0 0.0
  %307 = vmatprep.subr.mxu0 0.0
  %308 = vmatpush1.msra.mxu0 0.0
  %309 = vmatprep.subr.mxu0 0.0
  %310 = vmatpush1.msra.mxu0 0.0
  %311 = vmatprep.subr.mxu0 0.0
  %312 = vmatpush1.msra.mxu0 0.0
  %313 = vmatprep.mubr.f32.mxu0 0.0
  %314 = vmatmul.mubr.f32.gmra.mrb[0].mxu0 %v105
  %v315 = vpop.f32.mrb[0].mxu0
  %v316 = vadd.f32 %v82, %v315
  %v317 = vpop.f32.mrb[0].mxu0
  %v318 = vadd.f32 %v86, %v317
  %319 = vdwg.mxu0
  %320 = vmatprep.subr.mxu0 %v36
  %321 = vmatpush1.msra.mxu0 %v35
  %322 = vmatprep.subr.mxu0 %v44
  %323 = vmatpush1.msra.mxu0 %v43
  %324 = vmatprep.subr.mxu0 %v52
  %325 = vmatpush1.msra.mxu0 %v51
  %326 = vmatprep.subr.mxu0 %v60
  %327 = vmatpush1.msra.mxu0 %v59
  %328 = vmatprep.subr.mxu0 0.0
  %329 = vmatpush1.msra.mxu0 0.0
  %330 = vmatprep.subr.mxu0 0.0
  %331 = vmatpush1.msra.mxu0 0.0
  %332 = vmatprep.subr.mxu0 0.0
  %333 = vmatpush1.msra.mxu0 0.0
  %334 = vmatprep.subr.mxu0 0.0
  %335 = vmatpush1.msra.mxu0 0.0
  %336 = vmatprep.subr.mxu0 0.0
  %337 = vmatpush1.msra.mxu0 0.0
  %338 = vmatprep.subr.mxu0 0.0
  %339 = vmatpush1.msra.mxu0 0.0
  %340 = vmatprep.subr.mxu0 0.0
  %341 = vmatpush1.msra.mxu0 0.0
  %342 = vmatprep.subr.mxu0 0.0
  %343 = vmatpush1.msra.mxu0 0.0
  %344 = vmatprep.subr.mxu0 0.0
  %345 = vmatpush1.msra.mxu0 0.0
  %346 = vmatprep.subr.mxu0 0.0
  %347 = vmatpush1.msra.mxu0 0.0
  %348 = vmatprep.subr.mxu0 0.0
  %349 = vmatpush1.msra.mxu0 0.0
  %350 = vmatprep.subr.mxu0 0.0
  %351 = vmatpush1.msra.mxu0 0.0
  %352 = vmatprep.subr.mxu0 0.0
  %353 = vmatpush1.msra.mxu0 0.0
  %354 = vmatprep.subr.mxu0 0.0
  %355 = vmatpush1.msra.mxu0 0.0
  %356 = vmatprep.subr.mxu0 0.0
  %357 = vmatpush1.msra.mxu0 0.0
  %358 = vmatprep.subr.mxu0 0.0
  %359 = vmatpush1.msra.mxu0 0.0
  %360 = vmatprep.subr.mxu0 0.0
  %361 = vmatpush1.msra.mxu0 0.0
  %362 = vmatprep.subr.mxu0 0.0
  %363 = vmatpush1.msra.mxu0 0.0
  %364 = vmatprep.subr.mxu0 0.0
  %365 = vmatpush1.msra.mxu0 0.0
  %366 = vmatprep.subr.mxu0 0.0
  %367 = vmatpush1.msra.mxu0 0.0
  %368 = vmatprep.subr.mxu0 0.0
  %369 = vmatpush1.msra.mxu0 0.0
  %370 = vmatprep.subr.mxu0 0.0
  %371 = vmatpush1.msra.mxu0 0.0
  %372 = vmatprep.subr.mxu0 0.0
  %373 = vmatpush1.msra.mxu0 0.0
  %374 = vmatprep.subr.mxu0 0.0
  %375 = vmatpush1.msra.mxu0 0.0
  %376 = vmatprep.subr.mxu0 0.0
  %377 = vmatpush1.msra.mxu0 0.0
  %378 = vmatprep.subr.mxu0 0.0
  %379 = vmatpush1.msra.mxu0 0.0
  %380 = vmatprep.subr.mxu0 0.0
  %381 = vmatpush1.msra.mxu0 0.0
  %382 = vmatprep.subr.mxu0 0.0
  %383 = vmatpush1.msra.mxu0 0.0
  %384 = vmatprep.mubr.f32.mxu0 0.0
  %385 = vmatmul.mubr.f32.gmra.mrb[0].mxu0 %v105
  %v386 = vpop.f32.mrb[0].mxu0
  %v387 = vadd.f32 %v90, %v386
  %v388 = vpop.f32.mrb[0].mxu0
  %v389 = vadd.f32 %v94, %v388
  %390 = vdwg.mxu0
  %v391 = vmax.f32 %v174, 0.0
  %v392 = vmax.f32 %v176, 0.0
  %v393 = vmax.f32 %v245, 0.0
  %v394 = vmax.f32 %v247, 0.0
  %v395 = vmax.f32 %v316, 0.0
  %v396 = vmax.f32 %v318, 0.0
  %v397 = vmax.f32 %v387, 0.0
  %v398 = vmax.f32 %v389, 0.0
  %v399 = vld [vmem:[%s3] sm:$0xff]
  %v400 = vld [vmem:[%s3 + $0x8] sm:$0xff]
  %v401 = vld [vmem:[%s3 + $0x10] sm:$0xff]
  %v402 = vld [vmem:[%s3 + $0x18] sm:$0xff]
  %v403 = vld [vmem:[%s3 + $0x20] sm:$0xff]
  %v404 = vld [vmem:[%s3 + $0x28] sm:$0xff]
  %v405 = vld [vmem:[%s3 + $0x30] sm:$0xff]
  %v406 = vld [vmem:[%s3 + $0x38] sm:$0xff]
  %v407 = vld [vmem:[%s3 + $0x40] sm:$0xff]
  %v408 = vld [vmem:[%s3 + $0x48] sm:$0xff]
  %v409 = vld [vmem:[%s3 + $0x50] sm:$0xff]
  %v410 = vld [vmem:[%s3 + $0x58] sm:$0xff]
  %v411 = vld [vmem:[%s3 + $0x60] sm:$0xff]
  %v412 = vld [vmem:[%s3 + $0x68] sm:$0xff]
  %v413 = vld [vmem:[%s3 + $0x70] sm:$0xff]
  %v414 = vld [vmem:[%s3 + $0x78] sm:$0xff]
  %v415 = vld [vmem:[%s3 + $0x80] sm:$0xff]
  %v416 = vld [vmem:[%s3 + $0x88] sm:$0xff]
  %v417 = vld [vmem:[%s3 + $0x90] sm:$0xff]
  %v418 = vld [vmem:[%s3 + $0x98] sm:$0xff]
  %v419 = vld [vmem:[%s3 + $0xa0] sm:$0xff]
  %v420 = vld [vmem:[%s3 + $0xa8] sm:$0xff]
  %v421 = vld [vmem:[%s3 + $0xb0] sm:$0xff]
  %v422 = vld [vmem:[%s3 + $0xb8] sm:$0xff]
  %v423 = vld [vmem:[%s3 + $0xc0] sm:$0xff]
  %v424 = vld [vmem:[%s3 + $0xc8] sm:$0xff]
  %v425 = vld [vmem:[%s3 + $0xd0] sm:$0xff]
  %v426 = vld [vmem:[%s3 + $0xd8] sm:$0xff]
  %v427 = vld [vmem:[%s3 + $0xe0] sm:$0xff]
  %v428 = vld [vmem:[%s3 + $0xe8] sm:$0xff]
  %v429 = vld [vmem:[%s3 + $0xf0] sm:$0xff]
  %v430 = vld [vmem:[%s3 + $0xf8] sm:$0xff]
  %v431 = vld [vmem:[%s3 + $0x100] sm:$0xff]
  %v432 = vld [vmem:[%s3 + $0x108] sm:$0xff]
  %v433 = vld [vmem:[%s3 + $0x110] sm:$0xff]
  %v434 = vld [vmem:[%s3 + $0x118] sm:$0xff]
  %v435 = vld [vmem:[%s3 + $0x120] sm:$0xff]
  %v436 = vld [vmem:[%s3 + $0x128] sm:$0xff]
  %v437 = vld [vmem:[%s3 + $0x130] sm:$0xff]
  %v438 = vld [vmem:[%s3 + $0x138] sm:$0xff]
  %v439 = vld [vmem:[%s3 + $0x140] sm:$0xff]
  %v440 = vld [vmem:[%s3 + $0x148] sm:$0xff]
  %v441 = vld [vmem:[%s3 + $0x150] sm:$0xff]
  %v442 = vld [vmem:[%s3 + $0x158] sm:$0xff]
  %v443 = vld [vmem:[%s3 + $0x160] sm:$0xff]
  %v444 = vld [vmem:[%s3 + $0x168] sm:$0xff]
  %v445 = vld [vmem:[%s3 + $0x170] sm:$0xff]
  %v446 = vld [vmem:[%s3 + $0x178] sm:$0xff]
  %v447 = vld [vmem:[%s3 + $0x180] sm:$0xff]
  %v448 = vld [vmem:[%s3 + $0x188] sm:$0xff]
  %v449 = vld [vmem:[%s3 + $0x190] sm:$0xff]
  %v450 = vld [vmem:[%s3 + $0x198] sm:$0xff]
  %v451 = vld [vmem:[%s3 + $0x1a0] sm:$0xff]
  %v452 = vld [vmem:[%s3 + $0x1a8] sm:$0xff]
  %v453 = vld [vmem:[%s3 + $0x1b0] sm:$0xff]
  %v454 = vld [vmem:[%s3 + $0x1b8] sm:$0xff]
  %v455 = vld [vmem:[%s3 + $0x1c0] sm:$0xff]
  %v456 = vld [vmem:[%s3 + $0x1c8] sm:$0xff]
  %v457 = vld [vmem:[%s3 + $0x1d0] sm:$0xff]
  %v458 = vld [vmem:[%s3 + $0x1d8] sm:$0xff]
  %v459 = vld [vmem:[%s3 + $0x1e0] sm:$0xff]
  %v460 = vld [vmem:[%s3 + $0x1e8] sm:$0xff]
  %v461 = vld [vmem:[%s3 + $0x1f0] sm:$0xff]
  %v462 = vld [vmem:[%s3 + $0x1f8] sm:$0xff]
  %v463 = vld [vmem:[%s3 + $0x200] sm:$0xff]
  %v464 = vld [vmem:[%s3 + $0x208] sm:$0xff]
  %v465 = vld [vmem:[%s3 + $0x210] sm:$0xff]
  %v466 = vld [vmem:[%s3 + $0x218] sm:$0xff]
  %v467 = vld [vmem:[%s3 + $0x220] sm:$0xff]
  %v468 = vld [vmem:[%s3 + $0x228] sm:$0xff]
  %v469 = vld [vmem:[%s3 + $0x230] sm:$0xff]
  %v470 = vld [vmem:[%s3 + $0x238] sm:$0xff]
  %v471 = vld [vmem:[%s3 + $0x240] sm:$0xff]
  %v472 = vld [vmem:[%s3 + $0x248] sm:$0xff]
  %v473 = vld [vmem:[%s3 + $0x250] sm:$0xff]
  %v474 = vld [vmem:[%s3 + $0x258] sm:$0xff]
  %v475 = vld [vmem:[%s3 + $0x260] sm:$0xff]
  %v476 = vld [vmem:[%s3 + $0x268] sm:$0xff]
  %v477 = vld [vmem:[%s3 + $0x270] sm:$0xff]
  %v478 = vld [vmem:[%s3 + $0x278] sm:$0xff]
  %v479 = vld [vmem:[%s3 + $0x280] sm:$0xff]
  %v480 = vld [vmem:[%s3 + $0x288] sm:$0xff]
  %v481 = vld [vmem:[%s3 + $0x290] sm:$0xff]
  %v482 = vld [vmem:[%s3 + $0x298] sm:$0xff]
  %v483 = vld [vmem:[%s3 + $0x2a0] sm:$0xff]
  %v484 = vld [vmem:[%s3 + $0x2a8] sm:$0xff]
  %v485 = vld [vmem:[%s3 + $0x2b0] sm:$0xff]
  %v486 = vld [vmem:[%s3 + $0x2b8] sm:$0xff]
  %v487 = vld [vmem:[%s3 + $0x2c0] sm:$0xff]
  %v488 = vld [vmem:[%s3 + $0x2c8] sm:$0xff]
  %v489 = vld [vmem:[%s3 + $0x2d0] sm:$0xff]
  %v490 = vld [vmem:[%s3 + $0x2d8] sm:$0xff]
  %v491 = vld [vmem:[%s3 + $0x2e0] sm:$0xff]
  %v492 = vld [vmem:[%s3 + $0x2e8] sm:$0xff]
  %v493 = vld [vmem:[%s3 + $0x2f0] sm:$0xff]
  %v494 = vld [vmem:[%s3 + $0x2f8] sm:$0xff]
  %v495 = vld [vmem:[%s3 + $0x300] sm:$0xff]
  %v496 = vld [vmem:[%s3 + $0x308] sm:$0xff]
  %v497 = vld [vmem:[%s3 + $0x310] sm:$0xff]
  %v498 = vld [vmem:[%s3 + $0x318] sm:$0xff]
  %v499 = vld [vmem:[%s3 + $0x320] sm:$0xff]
  %v500 = vld [vmem:[%s3 + $0x328] sm:$0xff]
  %v501 = vld [vmem:[%s3 + $0x330] sm:$0xff]
  %v502 = vld [vmem:[%s3 + $0x338] sm:$0xff]
  %v503 = vld [vmem:[%s3 + $0x340] sm:$0xff]
  %v504 = vld [vmem:[%s3 + $0x348] sm:$0xff]
  %v505 = vld [vmem:[%s3 + $0x350] sm:$0xff]
  %v506 = vld [vmem:[%s3 + $0x358] sm:$0xff]
  %v507 = vld [vmem:[%s3 + $0x360] sm:$0xff]
  %v508 = vld [vmem:[%s3 + $0x368] sm:$0xff]
  %v509 = vld [vmem:[%s3 + $0x370] sm:$0xff]
  %v510 = vld [vmem:[%s3 + $0x378] sm:$0xff]
  %v511 = vld [vmem:[%s3 + $0x380] sm:$0xff]
  %v512 = vld [vmem:[%s3 + $0x388] sm:$0xff]
  %v513 = vld [vmem:[%s3 + $0x390] sm:$0xff]
  %v514 = vld [vmem:[%s3 + $0x398] sm:$0xff]
  %v515 = vld [vmem:[%s3 + $0x3a0] sm:$0xff]
  %v516 = vld [vmem:[%s3 + $0x3a8] sm:$0xff]
  %v517 = vld [vmem:[%s3 + $0x3b0] sm:$0xff]
  %v518 = vld [vmem:[%s3 + $0x3b8] sm:$0xff]
  %v519 = vld [vmem:[%s3 + $0x3c0] sm:$0xff]
  %v520 = vld [vmem:[%s3 + $0x3c8] sm:$0xff]
  %v521 = vld [vmem:[%s3 + $0x3d0] sm:$0xff]
  %v522 = vld [vmem:[%s3 + $0x3d8] sm:$0xff]
  %v523 = vld [vmem:[%s3 + $0x3e0] sm:$0xff]
  %v524 = vld [vmem:[%s3 + $0x3e8] sm:$0xff]
  %v525 = vld [vmem:[%s3 + $0x3f0] sm:$0xff]
  %v526 = vld [vmem:[%s3 + $0x3f8] sm:$0xff]
  %v527 = vld [vmem:[%s4] sm:$0x1]
  %v529 = vlaneseq
  %v530 = vshrl.u32 %v529, 7
  %v531 = vsub.s32 0, %v530
  %v532 = vrot.slane %v527, %v531
  %534 = vmatprep.subr.mxu0 0.0
  %535 = vmatpush1.msra.mxu0 %v399
  %536 = vmatprep.subr.mxu0 0.0
  %537 = vmatpush1.msra.mxu0 %v400
  %538 = vmatprep.subr.mxu0 0.0
  %539 = vmatpush1.msra.mxu0 %v401
  %540 = vmatprep.subr.mxu0 0.0
  %541 = vmatpush1.msra.mxu0 %v402
  %542 = vmatprep.subr.mxu0 0.0
  %543 = vmatpush1.msra.mxu0 %v403
  %544 = vmatprep.subr.mxu0 0.0
  %545 = vmatpush1.msra.mxu0 %v404
  %546 = vmatprep.subr.mxu0 0.0
  %547 = vmatpush1.msra.mxu0 %v405
  %548 = vmatprep.subr.mxu0 0.0
  %549 = vmatpush1.msra.mxu0 %v406
  %550 = vmatprep.subr.mxu0 0.0
  %551 = vmatpush1.msra.mxu0 %v407
  %552 = vmatprep.subr.mxu0 0.0
  %553 = vmatpush1.msra.mxu0 %v408
  %554 = vmatprep.subr.mxu0 0.0
  %555 = vmatpush1.msra.mxu0 %v409
  %556 = vmatprep.subr.mxu0 0.0
  %557 = vmatpush1.msra.mxu0 %v410
  %558 = vmatprep.subr.mxu0 0.0
  %559 = vmatpush1.msra.mxu0 %v411
  %560 = vmatprep.subr.mxu0 0.0
  %561 = vmatpush1.msra.mxu0 %v412
  %562 = vmatprep.subr.mxu0 0.0
  %563 = vmatpush1.msra.mxu0 %v413
  %564 = vmatprep.subr.mxu0 0.0
  %565 = vmatpush1.msra.mxu0 %v414
  %566 = vmatprep.subr.mxu0 0.0
  %567 = vmatpush1.msra.mxu0 %v415
  %568 = vmatprep.subr.mxu0 0.0
  %569 = vmatpush1.msra.mxu0 %v416
  %570 = vmatprep.subr.mxu0 0.0
  %571 = vmatpush1.msra.mxu0 %v417
  %572 = vmatprep.subr.mxu0 0.0
  %573 = vmatpush1.msra.mxu0 %v418
  %574 = vmatprep.subr.mxu0 0.0
  %575 = vmatpush1.msra.mxu0 %v419
  %576 = vmatprep.subr.mxu0 0.0
  %577 = vmatpush1.msra.mxu0 %v420
  %578 = vmatprep.subr.mxu0 0.0
  %579 = vmatpush1.msra.mxu0 %v421
  %580 = vmatprep.subr.mxu0 0.0
  %581 = vmatpush1.msra.mxu0 %v422
  %582 = vmatprep.subr.mxu0 0.0
  %583 = vmatpush1.msra.mxu0 %v423
  %584 = vmatprep.subr.mxu0 0.0
  %585 = vmatpush1.msra.mxu0 %v424
  %586 = vmatprep.subr.mxu0 0.0
  %587 = vmatpush1.msra.mxu0 %v425
  %588 = vmatprep.subr.mxu0 0.0
  %589 = vmatpush1.msra.mxu0 %v426
  %590 = vmatprep.subr.mxu0 0.0
  %591 = vmatpush1.msra.mxu0 %v427
  %592 = vmatprep.subr.mxu0 0.0
  %593 = vmatpush1.msra.mxu0 %v428
  %594 = vmatprep.subr.mxu0 0.0
  %595 = vmatpush1.msra.mxu0 %v429
  %596 = vmatprep.subr.mxu0 0.0
  %597 = vmatpush1.msra.mxu0 %v430
  %598 = vmatprep.mubr.f32.mxu0 %v392
  %599 = vmatmul.mubr.f32.gmra.mrb[0].mxu0 %v391
  %v600 = vpop.f32.mrb[0].mxu0
  %v601 = vadd.f32 %v532, %v600
  %v602 = vpop.f32.mrb[0].mxu0
  %603 = vdwg.mxu0
  %604 = vmatprep.subr.mxu0 0.0
  %605 = vmatpush1.msra.mxu0 %v431
  %606 = vmatprep.subr.mxu0 0.0
  %607 = vmatpush1.msra.mxu0 %v432
  %608 = vmatprep.subr.mxu0 0.0
  %609 = vmatpush1.msra.mxu0 %v433
  %610 = vmatprep.subr.mxu0 0.0
  %611 = vmatpush1.msra.mxu0 %v434
  %612 = vmatprep.subr.mxu0 0.0
  %613 = vmatpush1.msra.mxu0 %v435
  %614 = vmatprep.subr.mxu0 0.0
  %615 = vmatpush1.msra.mxu0 %v436
  %616 = vmatprep.subr.mxu0 0.0
  %617 = vmatpush1.msra.mxu0 %v437
  %618 = vmatprep.subr.mxu0 0.0
  %619 = vmatpush1.msra.mxu0 %v438
  %620 = vmatprep.subr.mxu0 0.0
  %621 = vmatpush1.msra.mxu0 %v439
  %622 = vmatprep.subr.mxu0 0.0
  %623 = vmatpush1.msra.mxu0 %v440
  %624 = vmatprep.subr.mxu0 0.0
  %625 = vmatpush1.msra.mxu0 %v441
  %626 = vmatprep.subr.mxu0 0.0
  %627 = vmatpush1.msra.mxu0 %v442
  %628 = vmatprep.subr.mxu0 0.0
  %629 = vmatpush1.msra.mxu0 %v443
  %630 = vmatprep.subr.mxu0 0.0
  %631 = vmatpush1.msra.mxu0 %v444
  %632 = vmatprep.subr.mxu0 0.0
  %633 = vmatpush1.msra.mxu0 %v445
  %634 = vmatprep.subr.mxu0 0.0
  %635 = vmatpush1.msra.mxu0 %v446
  %636 = vmatprep.subr.mxu0 0.0
  %637 = vmatpush1.msra.mxu0 %v447
  %638 = vmatprep.subr.mxu0 0.0
  %639 = vmatpush1.msra.mxu0 %v448
  %640 = vmatprep.subr.mxu0 0.0
  %641 = vmatpush1.msra.mxu0 %v449
  %642 = vmatprep.subr.mxu0 0.0
  %643 = vmatpush1.msra.mxu0 %v450
  %644 = vmatprep.subr.mxu0 0.0
  %645 = vmatpush1.msra.mxu0 %v451
  %646 = vmatprep.subr.mxu0 0.0
  %647 = vmatpush1.msra.mxu0 %v452
  %648 = vmatprep.subr.mxu0 0.0
  %649 = vmatpush1.msra.mxu0 %v453
  %650 = vmatprep.subr.mxu0 0.0
  %651 = vmatpush1.msra.mxu0 %v454
  %652 = vmatprep.subr.mxu0 0.0
  %653 = vmatpush1.msra.mxu0 %v455
  %654 = vmatprep.subr.mxu0 0.0
  %655 = vmatpush1.msra.mxu0 %v456
  %656 = vmatprep.subr.mxu0 0.0
  %657 = vmatpush1.msra.mxu0 %v457
  %658 = vmatprep.subr.mxu0 0.0
  %659 = vmatpush1.msra.mxu0 %v458
  %660 = vmatprep.subr.mxu0 0.0
  %661 = vmatpush1.msra.mxu0 %v459
  %662 = vmatprep.subr.mxu0 0.0
  %663 = vmatpush1.msra.mxu0 %v460
  %664 = vmatprep.subr.mxu0 0.0
  %665 = vmatpush1.msra.mxu0 %v461
  %666 = vmatprep.subr.mxu0 0.0
  %667 = vmatpush1.msra.mxu0 %v462
  %668 = vmatprep.mubr.f32.mxu0 %v394
  %669 = vmatmul.mubr.f32.gmra.mrb[0].mxu0 %v393
  %v670 = vpop.f32.mrb[0].mxu0
  %v671 = vadd.f32 %v601, %v670
  %v672 = vpop.f32.mrb[0].mxu0
  %673 = vdwg.mxu0
  %674 = vmatprep.subr.mxu0 0.0
  %675 = vmatpush1.msra.mxu0 %v463
  %676 = vmatprep.subr.mxu0 0.0
  %677 = vmatpush1.msra.mxu0 %v464
  %678 = vmatprep.subr.mxu0 0.0
  %679 = vmatpush1.msra.mxu0 %v465
  %680 = vmatprep.subr.mxu0 0.0
  %681 = vmatpush1.msra.mxu0 %v466
  %682 = vmatprep.subr.mxu0 0.0
  %683 = vmatpush1.msra.mxu0 %v467
  %684 = vmatprep.subr.mxu0 0.0
  %685 = vmatpush1.msra.mxu0 %v468
  %686 = vmatprep.subr.mxu0 0.0
  %687 = vmatpush1.msra.mxu0 %v469
  %688 = vmatprep.subr.mxu0 0.0
  %689 = vmatpush1.msra.mxu0 %v470
  %690 = vmatprep.subr.mxu0 0.0
  %691 = vmatpush1.msra.mxu0 %v471
  %692 = vmatprep.subr.mxu0 0.0
  %693 = vmatpush1.msra.mxu0 %v472
  %694 = vmatprep.subr.mxu0 0.0
  %695 = vmatpush1.msra.mxu0 %v473
  %696 = vmatprep.subr.mxu0 0.0
  %697 = vmatpush1.msra.mxu0 %v474
  %698 = vmatprep.subr.mxu0 0.0
  %699 = vmatpush1.msra.mxu0 %v475
  %700 = vmatprep.subr.mxu0 0.0
  %701 = vmatpush1.msra.mxu0 %v476
  %702 = vmatprep.subr.mxu0 0.0
  %703 = vmatpush1.msra.mxu0 %v477
  %704 = vmatprep.subr.mxu0 0.0
  %705 = vmatpush1.msra.mxu0 %v478
  %706 = vmatprep.subr.mxu0 0.0
  %707 = vmatpush1.msra.mxu0 %v479
  %708 = vmatprep.subr.mxu0 0.0
  %709 = vmatpush1.msra.mxu0 %v480
  %710 = vmatprep.subr.mxu0 0.0
  %711 = vmatpush1.msra.mxu0 %v481
  %712 = vmatprep.subr.mxu0 0.0
  %713 = vmatpush1.msra.mxu0 %v482
  %714 = vmatprep.subr.mxu0 0.0
  %715 = vmatpush1.msra.mxu0 %v483
  %716 = vmatprep.subr.mxu0 0.0
  %717 = vmatpush1.msra.mxu0 %v484
  %718 = vmatprep.subr.mxu0 0.0
  %719 = vmatpush1.msra.mxu0 %v485
  %720 = vmatprep.subr.mxu0 0.0
  %721 = vmatpush1.msra.mxu0 %v486
  %722 = vmatprep.subr.mxu0 0.0
  %723 = vmatpush1.msra.mxu0 %v487
  %724 = vmatprep.subr.mxu0 0.0
  %725 = vmatpush1.msra.mxu0 %v488
  %726 = vmatprep.subr.mxu0 0.0
  %727 = vmatpush1.msra.mxu0 %v489
  %728 = vmatprep.subr.mxu0 0.0
  %729 = vmatpush1.msra.mxu0 %v490
  %730 = vmatprep.subr.mxu0 0.0
  %731 = vmatpush1.msra.mxu0 %v491
  %732 = vmatprep.subr.mxu0 0.0
  %733 = vmatpush1.msra.mxu0 %v492
  %734 = vmatprep.subr.mxu0 0.0
  %735 = vmatpush1.msra.mxu0 %v493
  %736 = vmatprep.subr.mxu0 0.0
  %737 = vmatpush1.msra.mxu0 %v494
  %738 = vmatprep.mubr.f32.mxu0 %v396
  %739 = vmatmul.mubr.f32.gmra.mrb[0].mxu0 %v395
  %v740 = vpop.f32.mrb[0].mxu0
  %v741 = vadd.f32 %v671, %v740
  %v742 = vpop.f32.mrb[0].mxu0
  %743 = vdwg.mxu0
  %744 = vmatprep.subr.mxu0 0.0
  %745 = vmatpush1.msra.mxu0 %v495
  %746 = vmatprep.subr.mxu0 0.0
  %747 = vmatpush1.msra.mxu0 %v496
  %748 = vmatprep.subr.mxu0 0.0
  %749 = vmatpush1.msra.mxu0 %v497
  %750 = vmatprep.subr.mxu0 0.0
  %751 = vmatpush1.msra.mxu0 %v498
  %752 = vmatprep.subr.mxu0 0.0
  %753 = vmatpush1.msra.mxu0 %v499
  %754 = vmatprep.subr.mxu0 0.0
  %755 = vmatpush1.msra.mxu0 %v500
  %756 = vmatprep.subr.mxu0 0.0
  %757 = vmatpush1.msra.mxu0 %v501
  %758 = vmatprep.subr.mxu0 0.0
  %759 = vmatpush1.msra.mxu0 %v502
  %760 = vmatprep.subr.mxu0 0.0
  %761 = vmatpush1.msra.mxu0 %v503
  %762 = vmatprep.subr.mxu0 0.0
  %763 = vmatpush1.msra.mxu0 %v504
  %764 = vmatprep.subr.mxu0 0.0
  %765 = vmatpush1.msra.mxu0 %v505
  %766 = vmatprep.subr.mxu0 0.0
  %767 = vmatpush1.msra.mxu0 %v506
  %768 = vmatprep.subr.mxu0 0.0
  %769 = vmatpush1.msra.mxu0 %v507
  %770 = vmatprep.subr.mxu0 0.0
  %771 = vmatpush1.msra.mxu0 %v508
  %772 = vmatprep.subr.mxu0 0.0
  %773 = vmatpush1.msra.mxu0 %v509
  %774 = vmatprep.subr.mxu0 0.0
  %775 = vmatpush1.msra.mxu0 %v510
  %776 = vmatprep.subr.mxu0 0.0
  %777 = vmatpush1.msra.mxu0 %v511
  %778 = vmatprep.subr.mxu0 0.0
  %779 = vmatpush1.msra.mxu0 %v512
  %780 = vmatprep.subr.mxu0 0.0
  %781 = vmatpush1.msra.mxu0 %v513
  %782 = vmatprep.subr.mxu0 0.0
  %783 = vmatpush1.msra.mxu0 %v514
  %784 = vmatprep.subr.mxu0 0.0
  %785 = vmatpush1.msra.mxu0 %v515
  %786 = vmatprep.subr.mxu0 0.0
  %787 = vmatpush1.msra.mxu0 %v516
  %788 = vmatprep.subr.mxu0 0.0
  %789 = vmatpush1.msra.mxu0 %v517
  %790 = vmatprep.subr.mxu0 0.0
  %791 = vmatpush1.msra.mxu0 %v518
  %792 = vmatprep.subr.mxu0 0.0
  %793 = vmatpush1.msra.mxu0 %v519
  %794 = vmatprep.subr.mxu0 0.0
  %795 = vmatpush1.msra.mxu0 %v520
  %796 = vmatprep.subr.mxu0 0.0
  %797 = vmatpush1.msra.mxu0 %v521
  %798 = vmatprep.subr.mxu0 0.0
  %799 = vmatpush1.msra.mxu0 %v522
  %800 = vmatprep.subr.mxu0 0.0
  %801 = vmatpush1.msra.mxu0 %v523
  %802 = vmatprep.subr.mxu0 0.0
  %803 = vmatpush1.msra.mxu0 %v524
  %804 = vmatprep.subr.mxu0 0.0
  %805 = vmatpush1.msra.mxu0 %v525
  %806 = vmatprep.subr.mxu0 0.0
  %807 = vmatpush1.msra.mxu0 %v526
  %808 = vmatprep.mubr.f32.mxu0 %v398
  %809 = vmatmul.mubr.f32.gmra.mrb[0].mxu0 %v397
  %v810 = vpop.f32.mrb[0].mxu0
  %v811 = vadd.f32 %v741, %v810
  %v812 = vpop.f32.mrb[0].mxu0
  %813 = vdwg.mxu0
  %v814 = vmax.f32 %v811, 0.0
  %v817 = vunpack.c.l.s4 1966171168
  %v818 = vunpack.c.0.s8 %v817
  %v819 = vlaneseq
  %v820 = vshrl.u32 %v819, 7
  %v821 = vsub.s32 %v818, %v820
  %v822 = vrot.slane %v814, %v821
  %v823 = vcombine.high %v822, %v822
  %v825 = vunpack.c.l.s4 1966171168
  %v826 = vunpack.c.0.s8 %v825
  %v827 = vlaneseq
  %v828 = vshrl.u32 %v827, 7
  %v829 = vsub.s32 %v826, %v828
  %v830 = vrot.slane %v822, %v829
  %v832 = vunpack.c.l.s4 1966171168
  %v833 = vunpack.c.0.s8 %v832
  %v834 = vlaneseq
  %v835 = vshrl.u32 %v834, 7
  %v836 = vsub.s32 %v833, %v835
  %v837 = vrot.slane %v823, %v836
  %v840 = vld [vmem:[%s5] sm:$0x1]
  %v841 = vmul.f32 %v830, %v840
  %v842 = vmul.f32 %v837, %v840
  %vm843 = vcmask 516096
  %v844 = vsel %vm843, %v841, 0.0
  %845 = vadd.xlane.f32.xlu0 %v844
  %v846 = vpop.xlane.xlu0 %845
  %v847 = vsel %vm843, %v842, 0.0
  %848 = vadd.xlane.f32.xlu0 %v847
  %v849 = vpop.xlane.xlu0 %848
  %v850 = vld [vmem:[#allocation2] sm:$0x1]
  %v852 = vlaneseq
  %v853 = vshrl.u32 %v852, 7
  %v854 = vsub.s32 0, %v853
  %v855 = vrot.slane %v850, %v854
  %857 = vbcast.lane.b32.xlu0 %v855, 256
  %v858 = vpop.permute.xlu0 %857
  %v860 = vadd.f32 %v846, %v858
  %v861 = vadd.f32 %v849, %v858
  %v864 = vrot.slane %v861, 7
  %vm865 = vcmask 1041409
  %v866 = vsel %vm865, %v864, %v860
  %vm868 = vcmask 1024
  %869 = vst.msk [vmem:[%s7] sm:$0x3] %vm868, %v866
  // Predicated region
  $region30: #{masked_classifier_fwd.1} parent=0 // pred_check
    _
  $region31: #{masked_classifier_fwd.1} parent=0 // pred_check_branch
    %871 = sbr.rel (0) target = $region33
  $region32: #{masked_classifier_fwd.1} parent=0 // pred_region
    _
  $region33: #{masked_classifier_fwd.1} parent=0 // pred_fallthru
    _
  // Predicated region
  $region34: #{masked_classifier_fwd.1} parent=0 // pred_check
    _
  $region35: #{masked_classifier_fwd.1} parent=0 // pred_check_branch
    %873 = sbr.rel (0) target = $region37
  $region36: #{masked_classifier_fwd.1} parent=0 // pred_region
    _
  $region37: #{masked_classifier_fwd.1} parent=0 // pred_fallthru
    _

</llo_original>
